<compile_context>
chip_gen: v6e
topology: v6e:2x2x1
jax: 0.10.0
libtpu: 0.0.40
codegen_flags: <defaults>
</compile_context>

<pallas_src>
import math
import functools

import jax
import jax.numpy as jnp
from jax.experimental import pallas as pl
from jax.experimental.pallas import tpu as pltpu


# ---------------------------------------------------------------------------
# Kernels
# ---------------------------------------------------------------------------

def _ou_step_kernel(x_prev_ref, mu_ref, z_ref, x_out_ref, *, a, b, c):
    """One OU step: x_out = a*x_prev + b*mu + c*z  (constants folded)."""
    x_out_ref[...] = a * x_prev_ref[...] + b * mu_ref[...] + c * z_ref[...]


def _ou_rollout_kernel(x0_ref, mu_ref, z_ref, out_ref, xlast_ref, *, a, b, c,
                       num_steps):
    """Fused T-step OU rollout: recurrence carried in vregs, one launch."""
    x = x0_ref[...]            # (1, A)
    bmu = b * mu_ref[...]      # hoisted, reused every step
    z = z_ref[...]             # (T, A) noise loaded once
    for t in range(num_steps):                 # static unroll, stays in vregs
        x = a * x + bmu + c * z[t:t + 1, :]
        out_ref[t:t + 1, :] = x
    xlast_ref[...] = x


# ---------------------------------------------------------------------------
# Jitted wrappers (traced once per shape/static-arg combo)
# ---------------------------------------------------------------------------

_VMEM = pl.BlockSpec(memory_space=pltpu.MemorySpace.VMEM)


@functools.partial(jax.jit, static_argnames=("theta", "dt", "sigma"))
def ou_step(x_prev, mu, key, *, theta, dt, sigma):
    """One OU update. x_prev / mu: (A,) f32. Returns (x_new (A,), new_key)."""
    a = 1.0 - theta * dt
    b = theta * dt
    c = sigma * math.sqrt(dt)
    A = x_prev.shape[-1]

    key, sub = jax.random.split(key)
    x2 = x_prev.reshape(1, A).astype(jnp.float32)
    mu2 = mu.reshape(1, A).astype(jnp.float32)
    z2 = jax.random.normal(sub, (1, A), dtype=jnp.float32)

    out = pl.pallas_call(
        functools.partial(_ou_step_kernel, a=a, b=b, c=c),
        out_shape=jax.ShapeDtypeStruct((1, A), jnp.float32),
        in_specs=[_VMEM, _VMEM, _VMEM],
        out_specs=_VMEM,
        input_output_aliases={0: 0},           # x_prev buffer reused as output
    )(x2, mu2, z2)
    return out.reshape(A), key


@functools.partial(jax.jit,
                   static_argnames=("theta", "dt", "sigma", "num_steps"))
def ou_rollout(x_prev, mu, key, *, theta, dt, sigma, num_steps):
    """T fused OU steps in one pallas_call.

    Returns (traj (T, A), x_last (A,), new_key)."""
    a = 1.0 - theta * dt
    b = theta * dt
    c = sigma * math.sqrt(dt)
    A = x_prev.shape[-1]

    key, sub = jax.random.split(key)
    x2 = x_prev.reshape(1, A).astype(jnp.float32)
    mu2 = mu.reshape(1, A).astype(jnp.float32)
    z = jax.random.normal(sub, (num_steps, A), dtype=jnp.float32)

    traj, x_last = pl.pallas_call(
        functools.partial(_ou_rollout_kernel, a=a, b=b, c=c,
                          num_steps=num_steps),
        out_shape=(jax.ShapeDtypeStruct((num_steps, A), jnp.float32),
                   jax.ShapeDtypeStruct((1, A), jnp.float32)),
        in_specs=[_VMEM, _VMEM, _VMEM],
        out_specs=(_VMEM, _VMEM),
        input_output_aliases={0: 1},           # x_prev buffer reused as x_last
    )(x2, mu2, z)
    return traj, x_last.reshape(A), key


# ---------------------------------------------------------------------------
# Module-like wrapper
# ---------------------------------------------------------------------------

class OrnsteinUhlenbeckActionNoise:
    """Functional stand-in for the PyTorch module; the OU update runs in Pallas."""

    def __init__(self, action_size, sigma=0.3, theta=0.15, dt=0.01, mu=None,
                 x0=None, seed=0):
        self.action_size = action_size
        self.theta = theta
        self.sigma = sigma
        self.dt = dt
        self.mu = (jnp.zeros((action_size,), jnp.float32) if mu is None
                   else jnp.asarray(mu, jnp.float32))
        self.x0 = x0
        # PRNG key lives on device and is carried through the jitted step,
        # so no host-built seed array / host sync per call.
        self._key = jax.random.PRNGKey(seed)
        self.reset()

    def reset(self):
        self.x_prev = (jnp.asarray(self.x0, jnp.float32)
                       if self.x0 is not None
                       else jnp.zeros((self.action_size,), jnp.float32))

    # forward(xx): `xx` is ignored, matching the reference module.
    def __call__(self, xx):
        # TODO(synk): x_prev persistence is carried as a device array on the
        # Python side (like the nn.Module attribute); a cross-call
        # pl.get_global could hold the OU state in on-chip memory instead.
        x, self._key = ou_step(self.x_prev, self.mu, self._key,
                               theta=self.theta, dt=self.dt, sigma=self.sigma)
        self.x_prev = x
        return x

    forward = __call__

    def rollout(self, num_steps):
        """Run `num_steps` OU updates fused into a single kernel launch."""
        traj, x_last, self._key = ou_rollout(
            self.x_prev, self.mu, self._key,
            theta=self.theta, dt=self.dt, sigma=self.sigma,
            num_steps=num_steps)
        self.x_prev = x_last
        return traj


if __name__ == "__main__":
    ACTION_SIZE = 8
    NUM_STEPS = 32

    key = jax.random.PRNGKey(0)
    # Dummy forward input (ignored by the module's forward, as in the reference).
    xx = jax.random.normal(key, (2, ACTION_SIZE), dtype=jnp.float32)

    noise = OrnsteinUhlenbeckActionNoise(ACTION_SIZE)
    out1 = noise(xx)
    out2 = noise(xx)
    traj = noise.rollout(NUM_STEPS)
    jax.block_until_ready((out1, out2, traj))

    assert out1.shape == (ACTION_SIZE,) and out1.dtype == jnp.float32
    assert out2.shape == (ACTION_SIZE,) and out2.dtype == jnp.float32
    assert traj.shape == (NUM_STEPS, ACTION_SIZE) and traj.dtype == jnp.float32
    assert bool(jnp.all(jnp.isfinite(out1)))
    assert bool(jnp.all(jnp.isfinite(out2)))
    assert bool(jnp.all(jnp.isfinite(traj)))
    # Second call must differ from the first (state advanced + fresh noise).
    assert not bool(jnp.allclose(out1, out2))
    # Rollout state must have advanced as well.
    assert bool(jnp.allclose(noise.x_prev, traj[-1]))

    print("KERNEL_OK")
</pallas_src>

<mosaic_0001>
module attributes {stable_mosaic.version = 11 : i64} {
  func.func @_ou_step_kernel(%arg0: memref<1x8xf32, #tpu.memory_space<vmem>>, %arg1: memref<1x8xf32, #tpu.memory_space<vmem>>, %arg2: memref<1x8xf32, #tpu.memory_space<vmem>>, %arg3: memref<1x8xf32, #tpu.memory_space<vmem>>) attributes {dimension_semantics = [], scalar_prefetch = 0 : i64, scratch_operands = 0 : i64, tpu.core_type = #tpu.core_type<tc>} {
    %c0 = arith.constant 0 : index
    %c0_0 = arith.constant 0 : index
    %0 = vector.load %arg0[%c0, %c0_0] : memref<1x8xf32, #tpu.memory_space<vmem>>, vector<1x8xf32>
    %cst = arith.constant 0.998499989 : f32
    %1 = vector.broadcast %cst : f32 to vector<1x8xf32>
    %2 = arith.mulf %1, %0 : vector<1x8xf32>
    %c0_1 = arith.constant 0 : index
    %c0_2 = arith.constant 0 : index
    %3 = vector.load %arg1[%c0_1, %c0_2] : memref<1x8xf32, #tpu.memory_space<vmem>>, vector<1x8xf32>
    %cst_3 = arith.constant 1.500000e-03 : f32
    %4 = vector.broadcast %cst_3 : f32 to vector<1x8xf32>
    %5 = arith.mulf %4, %3 : vector<1x8xf32>
    %6 = arith.addf %2, %5 : vector<1x8xf32>
    %c0_4 = arith.constant 0 : index
    %c0_5 = arith.constant 0 : index
    %7 = vector.load %arg2[%c0_4, %c0_5] : memref<1x8xf32, #tpu.memory_space<vmem>>, vector<1x8xf32>
    %cst_6 = arith.constant 3.000000e-02 : f32
    %8 = vector.broadcast %cst_6 : f32 to vector<1x8xf32>
    %9 = arith.mulf %8, %7 : vector<1x8xf32>
    %10 = arith.addf %6, %9 : vector<1x8xf32>
    %c0_7 = arith.constant 0 : index
    %c0_8 = arith.constant 0 : index
    %11 = vector.load %arg3[%c0_7, %c0_8] : memref<1x8xf32, #tpu.memory_space<vmem>>, vector<1x8xf32>
    tpu.vector_store %arg3[%c0_7, %c0_8], %10 {strides = array<i32>} : memref<1x8xf32, #tpu.memory_space<vmem>>, vector<1x8xf32>,
    return
  }
}

</mosaic_0001>

<llo_original>
// kernel: ou_step.3
$region0: #{ou_step.3}
  #allocation0 [shape = 'u32[]', space=smem, size = 0x4, offset = 0x4, fixed_abs, tag = 'smem constant byte address 0x4 - core index']
  #allocation1 [shape = 'u32[144,128]{1,0:T(1,128)}', space=vmem, size = 0x12000, scoped, tag = 'internal scratch']
  %s0 = inlined_call_operand.vmem [shape: f32[1,8], index: 0, kind: input, shape index: {}, may-alias: {0,3}]
  %s1 = inlined_call_operand.vmem [shape: f32[1,8], index: 1, kind: input, shape index: {}]
  %s2 = inlined_call_operand.vmem [shape: f32[1,8], index: 2, kind: input, shape index: {}]
  %s3 = inlined_call_operand.vmem [shape: f32[1,8], index: 3, kind: output, shape index: {}, may-alias: {0,3}]
  %s4 = sld [smem:[#allocation0]]
  $region22: #{ou_step.3} parent=0
    _
  %s6 = ssub.s32 1, %s4
  %s7 = scalar_select 0, %s6, %s4
  // Predicated region
  $region2: #{ou_step.3} parent=0 // pred_check
    _
  $region3: #{ou_step.3} parent=0 // pred_check_branch
    %9 = sbr.rel (0) target = $region5
  $region4: #{ou_step.3} parent=0 // pred_region
    _
  $region5: #{ou_step.3} parent=0 // pred_fallthru
    _
  // Predicated region
  $region6: #{ou_step.3} parent=0 // pred_check
    _
  $region7: #{ou_step.3} parent=0 // pred_check_branch
    %11 = sbr.rel (0) target = $region9
  $region8: #{ou_step.3} parent=0 // pred_region
    _
  $region9: #{ou_step.3} parent=0 // pred_fallthru
    _
  // Predicated region
  $region10: #{ou_step.3} parent=0 // pred_check
    _
  $region11: #{ou_step.3} parent=0 // pred_check_branch
    %13 = sbr.rel (0) target = $region13
  $region12: #{ou_step.3} parent=0 // pred_region
    _
  $region13: #{ou_step.3} parent=0 // pred_fallthru
    _
  %v14 = vld [vmem:[%s0] sm:$0x1]
  %v15 = vmul.f32 %v14, 0.9985
  %v16 = vld [vmem:[%s1] sm:$0x1]
  %v17 = vmul.f32 %v16, 0.0015
  %v18 = vadd.f32 %v15, %v17
  %v19 = vld [vmem:[%s2] sm:$0x1]
  %v20 = vmul.f32 %v19, 0.03
  %v21 = vadd.f32 %v18, %v20
  %vm22 = vcmask 57344
  %23 = vst.msk [vmem:[%s3] sm:$0x1] %vm22, %v21
  // Predicated region
  $region14: #{ou_step.3} parent=0 // pred_check
    _
  $region15: #{ou_step.3} parent=0 // pred_check_branch
    %25 = sbr.rel (0) target = $region17
  $region16: #{ou_step.3} parent=0 // pred_region
    _
  $region17: #{ou_step.3} parent=0 // pred_fallthru
    _
  // Predicated region
  $region18: #{ou_step.3} parent=0 // pred_check
    _
  $region19: #{ou_step.3} parent=0 // pred_check_branch
    %27 = sbr.rel (0) target = $region21
  $region20: #{ou_step.3} parent=0 // pred_region
    _
  $region21: #{ou_step.3} parent=0 // pred_fallthru
    _

</llo_original>
